<compile_context>
chip_gen: v7x
topology: tpu7x:2x2x1
jax: 0.10.0
libtpu: 0.0.40
codegen_flags: <defaults>
</compile_context>

<pallas_src>
import jax
import jax.numpy as jnp
from jax.experimental import pallas as pl
from jax.experimental.pallas import tpu as pltpu

# ---- synthetic "config" ----------------------------------------------------
NUM_ACTION = 4
NUM_AGENT = 2
N_ACTIONS = NUM_ACTION ** NUM_AGENT   # 16
N_STATES = 8
HID1 = 20
HID2 = 40
BATCH = 2

# ---- padded / packed layout constants --------------------------------------
LANE = 128                 # lane width: all feature dims padded to this
TILE_B = 128               # batch rows per grid step (multiple of 8, MXU-friendly)

# Packed parameter slab layout (rows, all f32, 128 lanes wide):
#   [  0:128)  W1 padded   (real data in rows 0:8,   cols 0:20)
#   [128:256)  W2 padded   (real data in rows 0:20,  cols 0:40)
#   [256:384)  W3 padded   (real data in rows 0:40,  cols 0:16)
#   [384:392)  b1 in row 384, cols 0:20
#   [392:400)  b2 in row 392, cols 0:40
#   [400:408)  b3 in row 400, cols 0:16
_W1_ROW, _W2_ROW, _W3_ROW = 0, 128, 256
_B1_ROW, _B2_ROW, _B3_ROW = 384, 392, 400
SLAB_ROWS = 408            # multiple of 8


# ---- Pallas kernel: fused 3-layer MLP, one batch tile per grid step --------
def _mlp_kernel(x_ref, p_ref, out_ref):
    x = x_ref[...]                                   # [TILE_B, 128] f32

    w1 = p_ref[_W1_ROW:_W1_ROW + LANE, :]            # [128, 128]
    w2 = p_ref[_W2_ROW:_W2_ROW + LANE, :]
    w3 = p_ref[_W3_ROW:_W3_ROW + LANE, :]
    b1 = p_ref[_B1_ROW:_B1_ROW + 1, :]               # [1, 128] (broadcast add)
    b2 = p_ref[_B2_ROW:_B2_ROW + 1, :]
    b3 = p_ref[_B3_ROW:_B3_ROW + 1, :]

    # fc1 + ReLU  (padded cols of x / rows of w1 are zero -> exact result)
    h1 = jnp.maximum(
        jnp.dot(x, w1, preferred_element_type=jnp.float32) + b1, 0.0)
    # fc2 + ReLU
    h2 = jnp.maximum(
        jnp.dot(h1, w2, preferred_element_type=jnp.float32) + b2, 0.0)
    # fc3 (linear) -- lane-dense [TILE_B, 128] store; real values in cols 0:16
    out_ref[...] = jnp.dot(h2, w3, preferred_element_type=jnp.float32) + b3


def net_forward(x, params_slab):
    """x: [B, N_STATES] f32 -> actions_value: [B, N_ACTIONS] f32."""
    B = x.shape[0]
    B_pad = pl.cdiv(B, TILE_B) * TILE_B

    # Pad batch to a multiple of TILE_B and features to 128 lanes (zeros).
    x_pad = jnp.zeros((B_pad, LANE), jnp.float32).at[:B, :N_STATES].set(x)

    out_pad = pl.pallas_call(
        _mlp_kernel,
        out_shape=jax.ShapeDtypeStruct((B_pad, LANE), jnp.float32),
        grid_spec=pltpu.PrefetchScalarGridSpec(
            num_scalar_prefetch=0,
            grid=(B_pad // TILE_B,),
            in_specs=[
                # activations stream with the grid
                pl.BlockSpec((TILE_B, LANE), lambda i: (i, 0)),
                # single packed param slab, constant index -> stays resident
                pl.BlockSpec((SLAB_ROWS, LANE), lambda i: (0, 0)),
            ],
            out_specs=pl.BlockSpec((TILE_B, LANE), lambda i: (i, 0)),
        ),
        compiler_params=pltpu.CompilerParams(
            dimension_semantics=("parallel",)),   # 2 TCs on v7x; no-op elsewhere
    )(x_pad, params_slab)

    # Slice back to the logical shape (free in the XLA wrapper).
    return out_pad[:B, :N_ACTIONS]


# ---- deterministic parameter init (mirrors weight.data.normal_(0, 0.1)) ----
def init_params(key):
    k1, k2, k3, k4, k5, k6 = jax.random.split(key, 6)
    # PyTorch Linear weight is [out, in]; we store transposed [in, out].
    w1 = 0.1 * jax.random.normal(k1, (N_STATES, HID1), dtype=jnp.float32)
    w2 = 0.1 * jax.random.normal(k2, (HID1, HID2), dtype=jnp.float32)
    w3 = 0.1 * jax.random.normal(k3, (HID2, N_ACTIONS), dtype=jnp.float32)
    # PyTorch leaves biases at their default (uniform) init; use small
    # deterministic random biases so the bias path is actually exercised.
    b1 = 0.1 * jax.random.normal(k4, (HID1,), dtype=jnp.float32)
    b2 = 0.1 * jax.random.normal(k5, (HID2,), dtype=jnp.float32)
    b3 = 0.1 * jax.random.normal(k6, (N_ACTIONS,), dtype=jnp.float32)
    return (w1, b1, w2, b2, w3, b3)


def pack_params(params):
    """Pack (w1,b1,w2,b2,w3,b3) into one pre-padded (408,128) f32 slab."""
    w1, b1, w2, b2, w3, b3 = params
    slab = jnp.zeros((SLAB_ROWS, LANE), jnp.float32)
    slab = slab.at[_W1_ROW:_W1_ROW + N_STATES, 0:HID1].set(w1)
    slab = slab.at[_W2_ROW:_W2_ROW + HID1, 0:HID2].set(w2)
    slab = slab.at[_W3_ROW:_W3_ROW + HID2, 0:N_ACTIONS].set(w3)
    slab = slab.at[_B1_ROW, 0:HID1].set(b1)
    slab = slab.at[_B2_ROW, 0:HID2].set(b2)
    slab = slab.at[_B3_ROW, 0:N_ACTIONS].set(b3)
    return slab


def _reference(x, params):
    w1, b1, w2, b2, w3, b3 = params
    h1 = jnp.maximum(x @ w1 + b1[None, :], 0.0)
    h2 = jnp.maximum(h1 @ w2 + b2[None, :], 0.0)
    return h2 @ w3 + b3[None, :]


if __name__ == "__main__":
    key = jax.random.PRNGKey(0)
    kx, kp = jax.random.split(key)
    x = jax.random.normal(kx, (BATCH, N_STATES), dtype=jnp.float32)
    params = init_params(kp)
    params_slab = pack_params(params)

    out = net_forward(x, params_slab)
    out = jax.block_until_ready(out)

    ref = _reference(x, params)
    assert out.shape == (BATCH, N_ACTIONS)
    assert jnp.allclose(out, ref, atol=1e-5, rtol=1e-5)

    print("KERNEL_OK")
</pallas_src>

<mosaic_0001>
module attributes {stable_mosaic.version = 11 : i64} {
  func.func @_mlp_kernel(%arg0: i32, %arg1: memref<128x128xf32, #tpu.memory_space<vmem>>, %arg2: memref<408x128xf32, #tpu.memory_space<vmem>>, %arg3: memref<128x128xf32, #tpu.memory_space<vmem>>) attributes {dimension_semantics = [#tpu.dimension_semantics<parallel>], iteration_bounds = array<i64: 1>, scalar_prefetch = 0 : i64, scratch_operands = 0 : i64, tpu.core_type = #tpu.core_type<tc>, window_params = [{transform_indices = @transform_0, window_bounds = array<i64: 128, 128>}, {pipeline_mode = #tpu.pipeline_mode<synchronous>, transform_indices = @transform_1, window_bounds = array<i64: 408, 128>}, {transform_indices = @transform_2, window_bounds = array<i64: 128, 128>}]} {
    %c0 = arith.constant 0 : index
    %c0_0 = arith.constant 0 : index
    %0 = vector.load %arg1[%c0, %c0_0] : memref<128x128xf32, #tpu.memory_space<vmem>>, vector<128x128xf32>
    %c0_1 = arith.constant 0 : index
    %c0_2 = arith.constant 0 : index
    %1 = vector.load %arg2[%c0_1, %c0_2] : memref<408x128xf32, #tpu.memory_space<vmem>>, vector<128x128xf32>
    %c128 = arith.constant 128 : index
    %c0_3 = arith.constant 0 : index
    %2 = vector.load %arg2[%c128, %c0_3] : memref<408x128xf32, #tpu.memory_space<vmem>>, vector<128x128xf32>
    %c256 = arith.constant 256 : index
    %c0_4 = arith.constant 0 : index
    %3 = vector.load %arg2[%c256, %c0_4] : memref<408x128xf32, #tpu.memory_space<vmem>>, vector<128x128xf32>
    %c384 = arith.constant 384 : index
    %c0_5 = arith.constant 0 : index
    %4 = vector.load %arg2[%c384, %c0_5] : memref<408x128xf32, #tpu.memory_space<vmem>>, vector<1x128xf32>
    %c392 = arith.constant 392 : index
    %c0_6 = arith.constant 0 : index
    %5 = vector.load %arg2[%c392, %c0_6] : memref<408x128xf32, #tpu.memory_space<vmem>>, vector<1x128xf32>
    %c400 = arith.constant 400 : index
    %c0_7 = arith.constant 0 : index
    %6 = vector.load %arg2[%c400, %c0_7] : memref<408x128xf32, #tpu.memory_space<vmem>>, vector<1x128xf32>
    %cst = arith.constant dense<0.000000e+00> : vector<128x128xf32>
    %7 = tpu.matmul %0, %1, %cst {dimension_numbers = #tpu.dot_dimension_numbers<[1], [0], [0], [1], [0, 0, 1, 1], [], []>} : vector<128x128xf32>, vector<128x128xf32>, vector<128x128xf32> -> vector<128x128xf32>
    %8 = vector.broadcast %4 : vector<1x128xf32> to vector<128x128xf32>
    %9 = arith.addf %7, %8 : vector<128x128xf32>
    %cst_8 = arith.constant 0.000000e+00 : f32
    %10 = vector.broadcast %cst_8 : f32 to vector<128x128xf32>
    %11 = arith.maximumf %9, %10 : vector<128x128xf32>
    %cst_9 = arith.constant dense<0.000000e+00> : vector<128x128xf32>
    %12 = tpu.matmul %11, %2, %cst_9 {dimension_numbers = #tpu.dot_dimension_numbers<[1], [0], [0], [1], [0, 0, 1, 1], [], []>} : vector<128x128xf32>, vector<128x128xf32>, vector<128x128xf32> -> vector<128x128xf32>
    %13 = vector.broadcast %5 : vector<1x128xf32> to vector<128x128xf32>
    %14 = arith.addf %12, %13 : vector<128x128xf32>
    %cst_10 = arith.constant 0.000000e+00 : f32
    %15 = vector.broadcast %cst_10 : f32 to vector<128x128xf32>
    %16 = arith.maximumf %14, %15 : vector<128x128xf32>
    %cst_11 = arith.constant dense<0.000000e+00> : vector<128x128xf32>
    %17 = tpu.matmul %16, %3, %cst_11 {dimension_numbers = #tpu.dot_dimension_numbers<[1], [0], [0], [1], [0, 0, 1, 1], [], []>} : vector<128x128xf32>, vector<128x128xf32>, vector<128x128xf32> -> vector<128x128xf32>
    %18 = vector.broadcast %6 : vector<1x128xf32> to vector<128x128xf32>
    %19 = arith.addf %17, %18 : vector<128x128xf32>
    %c0_12 = arith.constant 0 : index
    %c0_13 = arith.constant 0 : index
    %20 = vector.load %arg3[%c0_12, %c0_13] : memref<128x128xf32, #tpu.memory_space<vmem>>, vector<128x128xf32>
    tpu.vector_store %arg3[%c0_12, %c0_13], %19 {strides = array<i32>} : memref<128x128xf32, #tpu.memory_space<vmem>>, vector<128x128xf32>,
    return
  }
  func.func @transform_0(%arg0: i32) -> (i32, i32) {
    %c0_i32 = arith.constant 0 : i32
    %c0_i32_0 = arith.constant 0 : i32
    return %arg0, %c0_i32 : i32, i32
  }
  func.func @transform_1(%arg0: i32) -> (i32, i32) {
    %c0_i32 = arith.constant 0 : i32
    %c0_i32_0 = arith.constant 0 : i32
    %c0_i32_1 = arith.constant 0 : i32
    return %c0_i32, %c0_i32_0 : i32, i32
  }
  func.func @transform_2(%arg0: i32) -> (i32, i32) {
    %c0_i32 = arith.constant 0 : i32
    %c0_i32_0 = arith.constant 0 : i32
    return %arg0, %c0_i32 : i32, i32
  }
}

</mosaic_0001>

<llo_original>
// kernel: tpu_custom_call.1
$region0: #{tpu_custom_call.1}
  #allocation0 [shape = 'u32[]', space=smem, size = 0x4, offset = 0x4, fixed_abs, tag = 'smem constant byte address 0x4 - core index']
  #allocation1 [shape = 'u32[144,128]{1,0:T(1,128)}', space=vmem, size = 0x12000, scoped, tag = 'internal scratch']
  %s0 = inlined_call_operand.hbm [shape: f32[128,128], index: 0, kind: input, shape index: {}]
  %s1 = inlined_call_operand.hbm [shape: f32[408,128], index: 1, kind: input, shape index: {}]
  %s2 = inlined_call_operand.hbm [shape: f32[128,128], index: 2, kind: output, shape index: {}]
  %s3 = sld [smem:[#allocation0]]
  $region26: #{tpu_custom_call.1} parent=0
    _
  %s5 = ssub.s32 1, %s3
  %s6 = scalar_select 0, %s5, %s3
  $region1: #{tpu_custom_call.1} parent=0
    #allocation2 [shape = 'u8[65536]{0}', space=vmem, size = 0x10000, scoped, tag = 'input window, operand 0, single buffered']
    #allocation3 [shape = 's32[1]{0}', space=sflag, size = 0x4, scoped, tag = 'scoped memory for tpu_custom_call.1']
    #allocation4 [shape = 's32[1]{0}', space=sflag, size = 0x4, scoped, tag = 'scoped memory for tpu_custom_call.1']
    #allocation5 [shape = 'u8[208896]{0}', space=vmem, size = 0x33000, scoped, tag = 'input window, operand 1, single buffered']
    #allocation6 [shape = 's32[1]{0}', space=sflag, size = 0x4, scoped, tag = 'scoped memory for tpu_custom_call.1']
    #allocation7 [shape = 'u8[65536]{0}', space=vmem, size = 0x10000, scoped, tag = 'output window, operand 0, single buffered']
    %7 = vsyncpa [#allocation3], 0
    %8 = vsyncpa [#allocation6], 0
    %9 = vsyncpa [#allocation4], 0
    // Predicated region
    $region2: #{tpu_custom_call.1} parent=1 // pred_check
      _
    $region3: #{tpu_custom_call.1} parent=1 // pred_check_branch
      %11 = sbr.rel (0) target = $region5
    $region4: #{tpu_custom_call.1} parent=1 // pred_region
      %s13 = ssub.s32 2048, 2048
      %14 = vsyncadd [#allocation3], %s13
      %s15 = sshll.u32 [#allocation2], 4
      %s16 = int_to_ptr.vmem [resolvable:$true] %s15
      %21 = dma.hbm_to_vmem [thread:$0]  %s0, 2048, %s16, [#allocation3], 128, 128, 8
    $region5: #{tpu_custom_call.1} parent=1 // pred_fallthru
      _
    // Predicated region
    $region6: #{tpu_custom_call.1} parent=1 // pred_check
      _
    $region7: #{tpu_custom_call.1} parent=1 // pred_check_branch
      %23 = sbr.rel (0) target = $region9
    $region8: #{tpu_custom_call.1} parent=1 // pred_region
      %s25 = ssub.s32 6528, 6528
      %26 = vsyncadd [#allocation6], %s25
      %s27 = sshll.u32 [#allocation5], 4
      %s28 = int_to_ptr.vmem [resolvable:$true] %s27
      %33 = dma.hbm_to_vmem [thread:$0]  %s1, 6528, %s28, [#allocation6], 128, 128, 8
    $region9: #{tpu_custom_call.1} parent=1 // pred_fallthru
      _
    // Predicated region
    $region10: #{tpu_custom_call.1} parent=1 // pred_check
      _
    $region11: #{tpu_custom_call.1} parent=1 // pred_check_branch
      %35 = sbr.rel (0) target = $region13
    $region12: #{tpu_custom_call.1} parent=1 // pred_region
      %36 = dma.done [#allocation3], 2048
    $region13: #{tpu_custom_call.1} parent=1 // pred_fallthru
      _
    // Predicated region
    $region14: #{tpu_custom_call.1} parent=1 // pred_check
      _
    $region15: #{tpu_custom_call.1} parent=1 // pred_check_branch
      %38 = sbr.rel (0) target = $region17
    $region16: #{tpu_custom_call.1} parent=1 // pred_region
      %39 = dma.done [#allocation6], 6528
    $region17: #{tpu_custom_call.1} parent=1 // pred_fallthru
      _
    %v40 = vld [vmem:[#allocation2] sm:$0xff]
    %v41 = vld [vmem:[#allocation2 + $0x8] sm:$0xff]
    %v42 = vld [vmem:[#allocation2 + $0x10] sm:$0xff]
    %v43 = vld [vmem:[#allocation2 + $0x18] sm:$0xff]
    %v44 = vld [vmem:[#allocation2 + $0x20] sm:$0xff]
    %v45 = vld [vmem:[#allocation2 + $0x28] sm:$0xff]
    %v46 = vld [vmem:[#allocation2 + $0x30] sm:$0xff]
    %v47 = vld [vmem:[#allocation2 + $0x38] sm:$0xff]
    %v48 = vld [vmem:[#allocation2 + $0x40] sm:$0xff]
    %v49 = vld [vmem:[#allocation2 + $0x48] sm:$0xff]
    %v50 = vld [vmem:[#allocation2 + $0x50] sm:$0xff]
    %v51 = vld [vmem:[#allocation2 + $0x58] sm:$0xff]
    %v52 = vld [vmem:[#allocation2 + $0x60] sm:$0xff]
    %v53 = vld [vmem:[#allocation2 + $0x68] sm:$0xff]
    %v54 = vld [vmem:[#allocation2 + $0x70] sm:$0xff]
    %v55 = vld [vmem:[#allocation2 + $0x78] sm:$0xff]
    %v56 = vld [vmem:[#allocation5] sm:$0xff]
    %v57 = vld [vmem:[#allocation5 + $0x8] sm:$0xff]
    %v58 = vld [vmem:[#allocation5 + $0x10] sm:$0xff]
    %v59 = vld [vmem:[#allocation5 + $0x18] sm:$0xff]
    %v60 = vld [vmem:[#allocation5 + $0x20] sm:$0xff]
    %v61 = vld [vmem:[#allocation5 + $0x28] sm:$0xff]
    %v62 = vld [vmem:[#allocation5 + $0x30] sm:$0xff]
    %v63 = vld [vmem:[#allocation5 + $0x38] sm:$0xff]
    %v64 = vld [vmem:[#allocation5 + $0x40] sm:$0xff]
    %v65 = vld [vmem:[#allocation5 + $0x48] sm:$0xff]
    %v66 = vld [vmem:[#allocation5 + $0x50] sm:$0xff]
    %v67 = vld [vmem:[#allocation5 + $0x58] sm:$0xff]
    %v68 = vld [vmem:[#allocation5 + $0x60] sm:$0xff]
    %v69 = vld [vmem:[#allocation5 + $0x68] sm:$0xff]
    %v70 = vld [vmem:[#allocation5 + $0x70] sm:$0xff]
    %v71 = vld [vmem:[#allocation5 + $0x78] sm:$0xff]
    %v72 = vld [vmem:[#allocation5 + $0x80] sm:$0xff]
    %v73 = vld [vmem:[#allocation5 + $0x88] sm:$0xff]
    %v74 = vld [vmem:[#allocation5 + $0x90] sm:$0xff]
    %v75 = vld [vmem:[#allocation5 + $0x98] sm:$0xff]
    %v76 = vld [vmem:[#allocation5 + $0xa0] sm:$0xff]
    %v77 = vld [vmem:[#allocation5 + $0xa8] sm:$0xff]
    %v78 = vld [vmem:[#allocation5 + $0xb0] sm:$0xff]
    %v79 = vld [vmem:[#allocation5 + $0xb8] sm:$0xff]
    %v80 = vld [vmem:[#allocation5 + $0xc0] sm:$0xff]
    %v81 = vld [vmem:[#allocation5 + $0xc8] sm:$0xff]
    %v82 = vld [vmem:[#allocation5 + $0xd0] sm:$0xff]
    %v83 = vld [vmem:[#allocation5 + $0xd8] sm:$0xff]
    %v84 = vld [vmem:[#allocation5 + $0xe0] sm:$0xff]
    %v85 = vld [vmem:[#allocation5 + $0xe8] sm:$0xff]
    %v86 = vld [vmem:[#allocation5 + $0xf0] sm:$0xff]
    %v87 = vld [vmem:[#allocation5 + $0xf8] sm:$0xff]
    %v88 = vld [vmem:[#allocation5 + $0x100] sm:$0xff]
    %v89 = vld [vmem:[#allocation5 + $0x108] sm:$0xff]
    %v90 = vld [vmem:[#allocation5 + $0x110] sm:$0xff]
    %v91 = vld [vmem:[#allocation5 + $0x118] sm:$0xff]
    %v92 = vld [vmem:[#allocation5 + $0x120] sm:$0xff]
    %v93 = vld [vmem:[#allocation5 + $0x128] sm:$0xff]
    %v94 = vld [vmem:[#allocation5 + $0x130] sm:$0xff]
    %v95 = vld [vmem:[#allocation5 + $0x138] sm:$0xff]
    %v96 = vld [vmem:[#allocation5 + $0x140] sm:$0xff]
    %v97 = vld [vmem:[#allocation5 + $0x148] sm:$0xff]
    %v98 = vld [vmem:[#allocation5 + $0x150] sm:$0xff]
    %v99 = vld [vmem:[#allocation5 + $0x158] sm:$0xff]
    %v100 = vld [vmem:[#allocation5 + $0x160] sm:$0xff]
    %v101 = vld [vmem:[#allocation5 + $0x168] sm:$0xff]
    %v102 = vld [vmem:[#allocation5 + $0x170] sm:$0xff]
    %v103 = vld [vmem:[#allocation5 + $0x178] sm:$0xff]
    %v104 = vld [vmem:[#allocation5 + $0x180] sm:$0x1]
    %v105 = vld [vmem:[#allocation5 + $0x188] sm:$0x1]
    %v106 = vld [vmem:[#allocation5 + $0x190] sm:$0x1]
    %v107 = vlaneseq
    %v108 = vshrl.u32 %v107, 7
    %v109 = vsub.s32 0, %v108
    %v110 = vrot.slane %v104, %v109
    %111 = vmatprep.subr.mxu0 0.0
    %112 = vmatpush1.msra.mxu0 %v56
    %113 = vmatprep.subr.mxu0 0.0
    %114 = vmatpush1.msra.mxu0 %v57
    %115 = vmatprep.subr.mxu0 0.0
    %116 = vmatpush1.msra.mxu0 %v58
    %117 = vmatprep.subr.mxu0 0.0
    %118 = vmatpush1.msra.mxu0 %v59
    %119 = vmatprep.subr.mxu0 0.0
    %120 = vmatpush1.msra.mxu0 %v60
    %121 = vmatprep.subr.mxu0 0.0
    %122 = vmatpush1.msra.mxu0 %v61
    %123 = vmatprep.subr.mxu0 0.0
    %124 = vmatpush1.msra.mxu0 %v62
    %125 = vmatprep.subr.mxu0 0.0
    %126 = vmatpush1.msra.mxu0 %v63
    %127 = vmatprep.subr.mxu0 0.0
    %128 = vmatpush1.msra.mxu0 %v64
    %129 = vmatprep.subr.mxu0 0.0
    %130 = vmatpush1.msra.mxu0 %v65
    %131 = vmatprep.subr.mxu0 0.0
    %132 = vmatpush1.msra.mxu0 %v66
    %133 = vmatprep.subr.mxu0 0.0
    %134 = vmatpush1.msra.mxu0 %v67
    %135 = vmatprep.subr.mxu0 0.0
    %136 = vmatpush1.msra.mxu0 %v68
    %137 = vmatprep.subr.mxu0 0.0
    %138 = vmatpush1.msra.mxu0 %v69
    %139 = vmatprep.subr.mxu0 0.0
    %140 = vmatpush1.msra.mxu0 %v70
    %141 = vmatprep.subr.mxu0 0.0
    %142 = vmatpush1.msra.mxu0 %v71
    %143 = vmatprep.subr.mxu0 0.0
    %144 = vmatpush1.msra.mxu0 0.0
    %145 = vmatprep.subr.mxu0 0.0
    %146 = vmatpush1.msra.mxu0 0.0
    %147 = vmatprep.subr.mxu0 0.0
    %148 = vmatpush1.msra.mxu0 0.0
    %149 = vmatprep.subr.mxu0 0.0
    %150 = vmatpush1.msra.mxu0 0.0
    %151 = vmatprep.subr.mxu0 0.0
    %152 = vmatpush1.msra.mxu0 0.0
    %153 = vmatprep.subr.mxu0 0.0
    %154 = vmatpush1.msra.mxu0 0.0
    %155 = vmatprep.subr.mxu0 0.0
    %156 = vmatpush1.msra.mxu0 0.0
    %157 = vmatprep.subr.mxu0 0.0
    %158 = vmatpush1.msra.mxu0 0.0
    %159 = vmatprep.subr.mxu0 0.0
    %160 = vmatpush1.msra.mxu0 0.0
    %161 = vmatprep.subr.mxu0 0.0
    %162 = vmatpush1.msra.mxu0 0.0
    %163 = vmatprep.subr.mxu0 0.0
    %164 = vmatpush1.msra.mxu0 0.0
    %165 = vmatprep.subr.mxu0 0.0
    %166 = vmatpush1.msra.mxu0 0.0
    %167 = vmatprep.subr.mxu0 0.0
    %168 = vmatpush1.msra.mxu0 0.0
    %169 = vmatprep.subr.mxu0 0.0
    %170 = vmatpush1.msra.mxu0 0.0
    %171 = vmatprep.subr.mxu0 0.0
    %172 = vmatpush1.msra.mxu0 0.0
    %173 = vmatprep.subr.mxu0 0.0
    %174 = vmatpush1.msra.mxu0 0.0
    %175 = vmatprep.mubr.f32.mxu0 0.0
    %176 = vmatmul.mubr.f32.gmra.mrb[0].mxu0 %v40
    %v177 = vpop.f32.mrb[0].mxu0
    %v178 = vadd.f32 %v110, %v177
    %v179 = vpop.f32.mrb[0].mxu0
    %180 = vmatprep.mubr.f32.mxu0 0.0
    %181 = vmatmul.mubr.f32.gmra.mrb[0].mxu0 %v41
    %v182 = vpop.f32.mrb[0].mxu0
    %v183 = vadd.f32 %v110, %v182
    %v184 = vpop.f32.mrb[0].mxu0
    %185 = vmatprep.mubr.f32.mxu0 0.0
    %186 = vmatmul.mubr.f32.gmra.mrb[0].mxu0 %v42
    %v187 = vpop.f32.mrb[0].mxu0
    %v188 = vadd.f32 %v110, %v187
    %v189 = vpop.f32.mrb[0].mxu0
    %190 = vmatprep.mubr.f32.mxu0 0.0
    %191 = vmatmul.mubr.f32.gmra.mrb[0].mxu0 %v43
    %v192 = vpop.f32.mrb[0].mxu0
    %v193 = vadd.f32 %v110, %v192
    %v194 = vpop.f32.mrb[0].mxu0
    %195 = vmatprep.mubr.f32.mxu0 0.0
    %196 = vmatmul.mubr.f32.gmra.mrb[0].mxu0 %v44
    %v197 = vpop.f32.mrb[0].mxu0
    %v198 = vadd.f32 %v110, %v197
    %v199 = vpop.f32.mrb[0].mxu0
    %200 = vmatprep.mubr.f32.mxu0 0.0
    %201 = vmatmul.mubr.f32.gmra.mrb[0].mxu0 %v45
    %v202 = vpop.f32.mrb[0].mxu0
    %v203 = vadd.f32 %v110, %v202
    %v204 = vpop.f32.mrb[0].mxu0
    %205 = vmatprep.mubr.f32.mxu0 0.0
    %206 = vmatmul.mubr.f32.gmra.mrb[0].mxu0 %v46
    %v207 = vpop.f32.mrb[0].mxu0
    %v208 = vadd.f32 %v110, %v207
    %v209 = vpop.f32.mrb[0].mxu0
    %210 = vmatprep.mubr.f32.mxu0 0.0
    %211 = vmatmul.mubr.f32.gmra.mrb[0].mxu0 %v47
    %v212 = vpop.f32.mrb[0].mxu0
    %v213 = vadd.f32 %v110, %v212
    %v214 = vpop.f32.mrb[0].mxu0
    %215 = vmatprep.mubr.f32.mxu0 0.0
    %216 = vmatmul.mubr.f32.gmra.mrb[0].mxu0 %v48
    %v217 = vpop.f32.mrb[0].mxu0
    %v218 = vadd.f32 %v110, %v217
    %v219 = vpop.f32.mrb[0].mxu0
    %220 = vmatprep.mubr.f32.mxu0 0.0
    %221 = vmatmul.mubr.f32.gmra.mrb[0].mxu0 %v49
    %v222 = vpop.f32.mrb[0].mxu0
    %v223 = vadd.f32 %v110, %v222
    %v224 = vpop.f32.mrb[0].mxu0
    %225 = vmatprep.mubr.f32.mxu0 0.0
    %226 = vmatmul.mubr.f32.gmra.mrb[0].mxu0 %v50
    %v227 = vpop.f32.mrb[0].mxu0
    %v228 = vadd.f32 %v110, %v227
    %v229 = vpop.f32.mrb[0].mxu0
    %230 = vmatprep.mubr.f32.mxu0 0.0
    %231 = vmatmul.mubr.f32.gmra.mrb[0].mxu0 %v51
    %v232 = vpop.f32.mrb[0].mxu0
    %v233 = vadd.f32 %v110, %v232
    %v234 = vpop.f32.mrb[0].mxu0
    %235 = vmatprep.mubr.f32.mxu0 0.0
    %236 = vmatmul.mubr.f32.gmra.mrb[0].mxu0 %v52
    %v237 = vpop.f32.mrb[0].mxu0
    %v238 = vadd.f32 %v110, %v237
    %v239 = vpop.f32.mrb[0].mxu0
    %240 = vmatprep.mubr.f32.mxu0 0.0
    %241 = vmatmul.mubr.f32.gmra.mrb[0].mxu0 %v53
    %v242 = vpop.f32.mrb[0].mxu0
    %v243 = vadd.f32 %v110, %v242
    %v244 = vpop.f32.mrb[0].mxu0
    %245 = vmatprep.mubr.f32.mxu0 0.0
    %246 = vmatmul.mubr.f32.gmra.mrb[0].mxu0 %v54
    %v247 = vpop.f32.mrb[0].mxu0
    %v248 = vadd.f32 %v110, %v247
    %v249 = vpop.f32.mrb[0].mxu0
    %250 = vmatprep.mubr.f32.mxu0 0.0
    %251 = vmatmul.mubr.f32.gmra.mrb[0].mxu0 %v55
    %v252 = vpop.f32.mrb[0].mxu0
    %v253 = vadd.f32 %v110, %v252
    %v254 = vpop.f32.mrb[0].mxu0
    %255 = vdwg.mxu0
    %v256 = vmax.f32 %v178, 0.0
    %v257 = vmax.f32 %v183, 0.0
    %v258 = vmax.f32 %v188, 0.0
    %v259 = vmax.f32 %v193, 0.0
    %v260 = vmax.f32 %v198, 0.0
    %v261 = vmax.f32 %v203, 0.0
    %v262 = vmax.f32 %v208, 0.0
    %v263 = vmax.f32 %v213, 0.0
    %v264 = vmax.f32 %v218, 0.0
    %v265 = vmax.f32 %v223, 0.0
    %v266 = vmax.f32 %v228, 0.0
    %v267 = vmax.f32 %v233, 0.0
    %v268 = vmax.f32 %v238, 0.0
    %v269 = vmax.f32 %v243, 0.0
    %v270 = vmax.f32 %v248, 0.0
    %v271 = vmax.f32 %v253, 0.0
    %v272 = vlaneseq
    %v273 = vshrl.u32 %v272, 7
    %v274 = vsub.s32 0, %v273
    %v275 = vrot.slane %v105, %v274
    %276 = vmatprep.subr.mxu0 0.0
    %277 = vmatpush1.msra.mxu0 %v72
    %278 = vmatprep.subr.mxu0 0.0
    %279 = vmatpush1.msra.mxu0 %v73
    %280 = vmatprep.subr.mxu0 0.0
    %281 = vmatpush1.msra.mxu0 %v74
    %282 = vmatprep.subr.mxu0 0.0
    %283 = vmatpush1.msra.mxu0 %v75
    %284 = vmatprep.subr.mxu0 0.0
    %285 = vmatpush1.msra.mxu0 %v76
    %286 = vmatprep.subr.mxu0 0.0
    %287 = vmatpush1.msra.mxu0 %v77
    %288 = vmatprep.subr.mxu0 0.0
    %289 = vmatpush1.msra.mxu0 %v78
    %290 = vmatprep.subr.mxu0 0.0
    %291 = vmatpush1.msra.mxu0 %v79
    %292 = vmatprep.subr.mxu0 0.0
    %293 = vmatpush1.msra.mxu0 %v80
    %294 = vmatprep.subr.mxu0 0.0
    %295 = vmatpush1.msra.mxu0 %v81
    %296 = vmatprep.subr.mxu0 0.0
    %297 = vmatpush1.msra.mxu0 %v82
    %298 = vmatprep.subr.mxu0 0.0
    %299 = vmatpush1.msra.mxu0 %v83
    %300 = vmatprep.subr.mxu0 0.0
    %301 = vmatpush1.msra.mxu0 %v84
    %302 = vmatprep.subr.mxu0 0.0
    %303 = vmatpush1.msra.mxu0 %v85
    %304 = vmatprep.subr.mxu0 0.0
    %305 = vmatpush1.msra.mxu0 %v86
    %306 = vmatprep.subr.mxu0 0.0
    %307 = vmatpush1.msra.mxu0 %v87
    %308 = vmatprep.subr.mxu0 0.0
    %309 = vmatpush1.msra.mxu0 0.0
    %310 = vmatprep.subr.mxu0 0.0
    %311 = vmatpush1.msra.mxu0 0.0
    %312 = vmatprep.subr.mxu0 0.0
    %313 = vmatpush1.msra.mxu0 0.0
    %314 = vmatprep.subr.mxu0 0.0
    %315 = vmatpush1.msra.mxu0 0.0
    %316 = vmatprep.subr.mxu0 0.0
    %317 = vmatpush1.msra.mxu0 0.0
    %318 = vmatprep.subr.mxu0 0.0
    %319 = vmatpush1.msra.mxu0 0.0
    %320 = vmatprep.subr.mxu0 0.0
    %321 = vmatpush1.msra.mxu0 0.0
    %322 = vmatprep.subr.mxu0 0.0
    %323 = vmatpush1.msra.mxu0 0.0
    %324 = vmatprep.subr.mxu0 0.0
    %325 = vmatpush1.msra.mxu0 0.0
    %326 = vmatprep.subr.mxu0 0.0
    %327 = vmatpush1.msra.mxu0 0.0
    %328 = vmatprep.subr.mxu0 0.0
    %329 = vmatpush1.msra.mxu0 0.0
    %330 = vmatprep.subr.mxu0 0.0
    %331 = vmatpush1.msra.mxu0 0.0
    %332 = vmatprep.subr.mxu0 0.0
    %333 = vmatpush1.msra.mxu0 0.0
    %334 = vmatprep.subr.mxu0 0.0
    %335 = vmatpush1.msra.mxu0 0.0
    %336 = vmatprep.subr.mxu0 0.0
    %337 = vmatpush1.msra.mxu0 0.0
    %338 = vmatprep.subr.mxu0 0.0
    %339 = vmatpush1.msra.mxu0 0.0
    %340 = vmatprep.mubr.f32.mxu0 0.0
    %341 = vmatmul.mubr.f32.gmra.mrb[0].mxu0 %v256
    %v342 = vpop.f32.mrb[0].mxu0
    %v343 = vadd.f32 %v275, %v342
    %v344 = vpop.f32.mrb[0].mxu0
    %345 = vmatprep.mubr.f32.mxu0 0.0
    %346 = vmatmul.mubr.f32.gmra.mrb[0].mxu0 %v257
    %v347 = vpop.f32.mrb[0].mxu0
    %v348 = vadd.f32 %v275, %v347
    %v349 = vpop.f32.mrb[0].mxu0
    %350 = vmatprep.mubr.f32.mxu0 0.0
    %351 = vmatmul.mubr.f32.gmra.mrb[0].mxu0 %v258
    %v352 = vpop.f32.mrb[0].mxu0
    %v353 = vadd.f32 %v275, %v352
    %v354 = vpop.f32.mrb[0].mxu0
    %355 = vmatprep.mubr.f32.mxu0 0.0
    %356 = vmatmul.mubr.f32.gmra.mrb[0].mxu0 %v259
    %v357 = vpop.f32.mrb[0].mxu0
    %v358 = vadd.f32 %v275, %v357
    %v359 = vpop.f32.mrb[0].mxu0
    %360 = vmatprep.mubr.f32.mxu0 0.0
    %361 = vmatmul.mubr.f32.gmra.mrb[0].mxu0 %v260
    %v362 = vpop.f32.mrb[0].mxu0
    %v363 = vadd.f32 %v275, %v362
    %v364 = vpop.f32.mrb[0].mxu0
    %365 = vmatprep.mubr.f32.mxu0 0.0
    %366 = vmatmul.mubr.f32.gmra.mrb[0].mxu0 %v261
    %v367 = vpop.f32.mrb[0].mxu0
    %v368 = vadd.f32 %v275, %v367
    %v369 = vpop.f32.mrb[0].mxu0
    %370 = vmatprep.mubr.f32.mxu0 0.0
    %371 = vmatmul.mubr.f32.gmra.mrb[0].mxu0 %v262
    %v372 = vpop.f32.mrb[0].mxu0
    %v373 = vadd.f32 %v275, %v372
    %v374 = vpop.f32.mrb[0].mxu0
    %375 = vmatprep.mubr.f32.mxu0 0.0
    %376 = vmatmul.mubr.f32.gmra.mrb[0].mxu0 %v263
    %v377 = vpop.f32.mrb[0].mxu0
    %v378 = vadd.f32 %v275, %v377
    %v379 = vpop.f32.mrb[0].mxu0
    %380 = vmatprep.mubr.f32.mxu0 0.0
    %381 = vmatmul.mubr.f32.gmra.mrb[0].mxu0 %v264
    %v382 = vpop.f32.mrb[0].mxu0
    %v383 = vadd.f32 %v275, %v382
    %v384 = vpop.f32.mrb[0].mxu0
    %385 = vmatprep.mubr.f32.mxu0 0.0
    %386 = vmatmul.mubr.f32.gmra.mrb[0].mxu0 %v265
    %v387 = vpop.f32.mrb[0].mxu0
    %v388 = vadd.f32 %v275, %v387
    %v389 = vpop.f32.mrb[0].mxu0
    %390 = vmatprep.mubr.f32.mxu0 0.0
    %391 = vmatmul.mubr.f32.gmra.mrb[0].mxu0 %v266
    %v392 = vpop.f32.mrb[0].mxu0
    %v393 = vadd.f32 %v275, %v392
    %v394 = vpop.f32.mrb[0].mxu0
    %395 = vmatprep.mubr.f32.mxu0 0.0
    %396 = vmatmul.mubr.f32.gmra.mrb[0].mxu0 %v267
    %v397 = vpop.f32.mrb[0].mxu0
    %v398 = vadd.f32 %v275, %v397
    %v399 = vpop.f32.mrb[0].mxu0
    %400 = vmatprep.mubr.f32.mxu0 0.0
    %401 = vmatmul.mubr.f32.gmra.mrb[0].mxu0 %v268
    %v402 = vpop.f32.mrb[0].mxu0
    %v403 = vadd.f32 %v275, %v402
    %v404 = vpop.f32.mrb[0].mxu0
    %405 = vmatprep.mubr.f32.mxu0 0.0
    %406 = vmatmul.mubr.f32.gmra.mrb[0].mxu0 %v269
    %v407 = vpop.f32.mrb[0].mxu0
    %v408 = vadd.f32 %v275, %v407
    %v409 = vpop.f32.mrb[0].mxu0
    %410 = vmatprep.mubr.f32.mxu0 0.0
    %411 = vmatmul.mubr.f32.gmra.mrb[0].mxu0 %v270
    %v412 = vpop.f32.mrb[0].mxu0
    %v413 = vadd.f32 %v275, %v412
    %v414 = vpop.f32.mrb[0].mxu0
    %415 = vmatprep.mubr.f32.mxu0 0.0
    %416 = vmatmul.mubr.f32.gmra.mrb[0].mxu0 %v271
    %v417 = vpop.f32.mrb[0].mxu0
    %v418 = vadd.f32 %v275, %v417
    %v419 = vpop.f32.mrb[0].mxu0
    %420 = vdwg.mxu0
    %v421 = vmax.f32 %v343, 0.0
    %v422 = vmax.f32 %v348, 0.0
    %v423 = vmax.f32 %v353, 0.0
    %v424 = vmax.f32 %v358, 0.0
    %v425 = vmax.f32 %v363, 0.0
    %v426 = vmax.f32 %v368, 0.0
    %v427 = vmax.f32 %v373, 0.0
    %v428 = vmax.f32 %v378, 0.0
    %v429 = vmax.f32 %v383, 0.0
    %v430 = vmax.f32 %v388, 0.0
    %v431 = vmax.f32 %v393, 0.0
    %v432 = vmax.f32 %v398, 0.0
    %v433 = vmax.f32 %v403, 0.0
    %v434 = vmax.f32 %v408, 0.0
    %v435 = vmax.f32 %v413, 0.0
    %v436 = vmax.f32 %v418, 0.0
    %v437 = vlaneseq
    %v438 = vshrl.u32 %v437, 7
    %v439 = vsub.s32 0, %v438
    %v440 = vrot.slane %v106, %v439
    %441 = vmatprep.subr.mxu0 0.0
    %442 = vmatpush1.msra.mxu0 %v88
    %443 = vmatprep.subr.mxu0 0.0
    %444 = vmatpush1.msra.mxu0 %v89
    %445 = vmatprep.subr.mxu0 0.0
    %446 = vmatpush1.msra.mxu0 %v90
    %447 = vmatprep.subr.mxu0 0.0
    %448 = vmatpush1.msra.mxu0 %v91
    %449 = vmatprep.subr.mxu0 0.0
    %450 = vmatpush1.msra.mxu0 %v92
    %451 = vmatprep.subr.mxu0 0.0
    %452 = vmatpush1.msra.mxu0 %v93
    %453 = vmatprep.subr.mxu0 0.0
    %454 = vmatpush1.msra.mxu0 %v94
    %455 = vmatprep.subr.mxu0 0.0
    %456 = vmatpush1.msra.mxu0 %v95
    %457 = vmatprep.subr.mxu0 0.0
    %458 = vmatpush1.msra.mxu0 %v96
    %459 = vmatprep.subr.mxu0 0.0
    %460 = vmatpush1.msra.mxu0 %v97
    %461 = vmatprep.subr.mxu0 0.0
    %462 = vmatpush1.msra.mxu0 %v98
    %463 = vmatprep.subr.mxu0 0.0
    %464 = vmatpush1.msra.mxu0 %v99
    %465 = vmatprep.subr.mxu0 0.0
    %466 = vmatpush1.msra.mxu0 %v100
    %467 = vmatprep.subr.mxu0 0.0
    %468 = vmatpush1.msra.mxu0 %v101
    %469 = vmatprep.subr.mxu0 0.0
    %470 = vmatpush1.msra.mxu0 %v102
    %471 = vmatprep.subr.mxu0 0.0
    %472 = vmatpush1.msra.mxu0 %v103
    %473 = vmatprep.subr.mxu0 0.0
    %474 = vmatpush1.msra.mxu0 0.0
    %475 = vmatprep.subr.mxu0 0.0
    %476 = vmatpush1.msra.mxu0 0.0
    %477 = vmatprep.subr.mxu0 0.0
    %478 = vmatpush1.msra.mxu0 0.0
    %479 = vmatprep.subr.mxu0 0.0
    %480 = vmatpush1.msra.mxu0 0.0
    %481 = vmatprep.subr.mxu0 0.0
    %482 = vmatpush1.msra.mxu0 0.0
    %483 = vmatprep.subr.mxu0 0.0
    %484 = vmatpush1.msra.mxu0 0.0
    %485 = vmatprep.subr.mxu0 0.0
    %486 = vmatpush1.msra.mxu0 0.0
    %487 = vmatprep.subr.mxu0 0.0
    %488 = vmatpush1.msra.mxu0 0.0
    %489 = vmatprep.subr.mxu0 0.0
    %490 = vmatpush1.msra.mxu0 0.0
    %491 = vmatprep.subr.mxu0 0.0
    %492 = vmatpush1.msra.mxu0 0.0
    %493 = vmatprep.subr.mxu0 0.0
    %494 = vmatpush1.msra.mxu0 0.0
    %495 = vmatprep.subr.mxu0 0.0
    %496 = vmatpush1.msra.mxu0 0.0
    %497 = vmatprep.subr.mxu0 0.0
    %498 = vmatpush1.msra.mxu0 0.0
    %499 = vmatprep.subr.mxu0 0.0
    %500 = vmatpush1.msra.mxu0 0.0
    %501 = vmatprep.subr.mxu0 0.0
    %502 = vmatpush1.msra.mxu0 0.0
    %503 = vmatprep.subr.mxu0 0.0
    %504 = vmatpush1.msra.mxu0 0.0
    %505 = vmatprep.mubr.f32.mxu0 0.0
    %506 = vmatmul.mubr.f32.gmra.mrb[0].mxu0 %v421
    %v507 = vpop.f32.mrb[0].mxu0
    %v508 = vadd.f32 %v440, %v507
    %v509 = vpop.f32.mrb[0].mxu0
    %510 = vmatprep.mubr.f32.mxu0 0.0
    %511 = vmatmul.mubr.f32.gmra.mrb[0].mxu0 %v422
    %v512 = vpop.f32.mrb[0].mxu0
    %v513 = vadd.f32 %v440, %v512
    %v514 = vpop.f32.mrb[0].mxu0
    %515 = vmatprep.mubr.f32.mxu0 0.0
    %516 = vmatmul.mubr.f32.gmra.mrb[0].mxu0 %v423
    %v517 = vpop.f32.mrb[0].mxu0
    %v518 = vadd.f32 %v440, %v517
    %v519 = vpop.f32.mrb[0].mxu0
    %520 = vmatprep.mubr.f32.mxu0 0.0
    %521 = vmatmul.mubr.f32.gmra.mrb[0].mxu0 %v424
    %v522 = vpop.f32.mrb[0].mxu0
    %v523 = vadd.f32 %v440, %v522
    %v524 = vpop.f32.mrb[0].mxu0
    %525 = vmatprep.mubr.f32.mxu0 0.0
    %526 = vmatmul.mubr.f32.gmra.mrb[0].mxu0 %v425
    %v527 = vpop.f32.mrb[0].mxu0
    %v528 = vadd.f32 %v440, %v527
    %v529 = vpop.f32.mrb[0].mxu0
    %530 = vmatprep.mubr.f32.mxu0 0.0
    %531 = vmatmul.mubr.f32.gmra.mrb[0].mxu0 %v426
    %v532 = vpop.f32.mrb[0].mxu0
    %v533 = vadd.f32 %v440, %v532
    %v534 = vpop.f32.mrb[0].mxu0
    %535 = vmatprep.mubr.f32.mxu0 0.0
    %536 = vmatmul.mubr.f32.gmra.mrb[0].mxu0 %v427
    %v537 = vpop.f32.mrb[0].mxu0
    %v538 = vadd.f32 %v440, %v537
    %v539 = vpop.f32.mrb[0].mxu0
    %540 = vmatprep.mubr.f32.mxu0 0.0
    %541 = vmatmul.mubr.f32.gmra.mrb[0].mxu0 %v428
    %v542 = vpop.f32.mrb[0].mxu0
    %v543 = vadd.f32 %v440, %v542
    %v544 = vpop.f32.mrb[0].mxu0
    %545 = vmatprep.mubr.f32.mxu0 0.0
    %546 = vmatmul.mubr.f32.gmra.mrb[0].mxu0 %v429
    %v547 = vpop.f32.mrb[0].mxu0
    %v548 = vadd.f32 %v440, %v547
    %v549 = vpop.f32.mrb[0].mxu0
    %550 = vmatprep.mubr.f32.mxu0 0.0
    %551 = vmatmul.mubr.f32.gmra.mrb[0].mxu0 %v430
    %v552 = vpop.f32.mrb[0].mxu0
    %v553 = vadd.f32 %v440, %v552
    %v554 = vpop.f32.mrb[0].mxu0
    %555 = vmatprep.mubr.f32.mxu0 0.0
    %556 = vmatmul.mubr.f32.gmra.mrb[0].mxu0 %v431
    %v557 = vpop.f32.mrb[0].mxu0
    %v558 = vadd.f32 %v440, %v557
    %v559 = vpop.f32.mrb[0].mxu0
    %560 = vmatprep.mubr.f32.mxu0 0.0
    %561 = vmatmul.mubr.f32.gmra.mrb[0].mxu0 %v432
    %v562 = vpop.f32.mrb[0].mxu0
    %v563 = vadd.f32 %v440, %v562
    %v564 = vpop.f32.mrb[0].mxu0
    %565 = vmatprep.mubr.f32.mxu0 0.0
    %566 = vmatmul.mubr.f32.gmra.mrb[0].mxu0 %v433
    %v567 = vpop.f32.mrb[0].mxu0
    %v568 = vadd.f32 %v440, %v567
    %v569 = vpop.f32.mrb[0].mxu0
    %570 = vmatprep.mubr.f32.mxu0 0.0
    %571 = vmatmul.mubr.f32.gmra.mrb[0].mxu0 %v434
    %v572 = vpop.f32.mrb[0].mxu0
    %v573 = vadd.f32 %v440, %v572
    %v574 = vpop.f32.mrb[0].mxu0
    %575 = vmatprep.mubr.f32.mxu0 0.0
    %576 = vmatmul.mubr.f32.gmra.mrb[0].mxu0 %v435
    %v577 = vpop.f32.mrb[0].mxu0
    %v578 = vadd.f32 %v440, %v577
    %v579 = vpop.f32.mrb[0].mxu0
    %580 = vmatprep.mubr.f32.mxu0 0.0
    %581 = vmatmul.mubr.f32.gmra.mrb[0].mxu0 %v436
    %v582 = vpop.f32.mrb[0].mxu0
    %v583 = vadd.f32 %v440, %v582
    %v584 = vpop.f32.mrb[0].mxu0
    %585 = vdwg.mxu0
    %586 = vst [vmem:[#allocation7] sm:$0xff] %v508
    %587 = vst [vmem:[#allocation7 + $0x8] sm:$0xff] %v513
    %588 = vst [vmem:[#allocation7 + $0x10] sm:$0xff] %v518
    %589 = vst [vmem:[#allocation7 + $0x18] sm:$0xff] %v523
    %590 = vst [vmem:[#allocation7 + $0x20] sm:$0xff] %v528
    %591 = vst [vmem:[#allocation7 + $0x28] sm:$0xff] %v533
    %592 = vst [vmem:[#allocation7 + $0x30] sm:$0xff] %v538
    %593 = vst [vmem:[#allocation7 + $0x38] sm:$0xff] %v543
    %594 = vst [vmem:[#allocation7 + $0x40] sm:$0xff] %v548
    %595 = vst [vmem:[#allocation7 + $0x48] sm:$0xff] %v553
    %596 = vst [vmem:[#allocation7 + $0x50] sm:$0xff] %v558
    %597 = vst [vmem:[#allocation7 + $0x58] sm:$0xff] %v563
    %598 = vst [vmem:[#allocation7 + $0x60] sm:$0xff] %v568
    %599 = vst [vmem:[#allocation7 + $0x68] sm:$0xff] %v573
    %600 = vst [vmem:[#allocation7 + $0x70] sm:$0xff] %v578
    %601 = vst [vmem:[#allocation7 + $0x78] sm:$0xff] %v583
    // Predicated region
    $region18: #{tpu_custom_call.1} parent=1 // pred_check
      _
    $region19: #{tpu_custom_call.1} parent=1 // pred_check_branch
      %603 = sbr.rel (0) target = $region21
    $region20: #{tpu_custom_call.1} parent=1 // pred_region
      %s605 = ssub.s32 2048, 2048
      %606 = vsyncadd [#allocation4], %s605
      %s607 = sshll.u32 [#allocation7], 4
      %s608 = int_to_ptr.vmem [resolvable:$true] %s607
      %613 = dma.vmem_to_hbm [thread:$0]  %s608, 2048, %s2, [#allocation4], 128, 128, 8
    $region21: #{tpu_custom_call.1} parent=1 // pred_fallthru
      _
    // Predicated region
    $region22: #{tpu_custom_call.1} parent=1 // pred_check
      _
    $region23: #{tpu_custom_call.1} parent=1 // pred_check_branch
      %615 = sbr.rel (0) target = $region25
    $region24: #{tpu_custom_call.1} parent=1 // pred_region
      %616 = dma.done [#allocation4], 2048
    $region25: #{tpu_custom_call.1} parent=1 // pred_fallthru
      _
    %617 = vsyncpa [#allocation3], 1
    %618 = vsyncpa [#allocation6], 1
    %619 = vsyncpa [#allocation4], 1

</llo_original>
